<compile_context>
chip_gen: v5e
topology: v5e:2x2
jax: 0.10.0
libtpu: 0.0.40
codegen_flags: <defaults>
</compile_context>

<pallas_src>
import functools

import jax
import jax.numpy as jnp
from jax.experimental import pallas as pl
from jax.experimental.pallas import tpu as pltpu

SSL_FEATURES = 768  # self.ssl_features in the PyTorch module


def _vmem_capacity_bytes():
    """Physical VMEM of the local TPU; conservative fallback if unavailable."""
    try:
        info = pltpu.get_tpu_info()
        cap = getattr(info, "vmem_capacity_bytes", None)
        if cap:
            return int(cap)
    except Exception:
        pass
    return 64 * 1024 * 1024  # v7x per-TensorCore capacity (safe lower bound)


def _mos_sum_kernel(x_ref, o_ref, *, n_t, n_blocks, rem, has_pad):
    """Grid = (core_split, batch_tile, time_block).

    Accumulates an f32 partial time-sum for this core's share of the time
    blocks directly into its (1, tile_b, D) output block, which stays resident
    in VMEM across the innermost "arbitrary" axis. Only the final global time
    block is ragged; it uses a static slice (rem is a Python int). All other
    steps take the unmasked fast path (no iota / where).
    """
    p = pl.program_id(0)
    ti = pl.program_id(2)
    gblk = p * n_t + ti  # global time-block index handled by this step

    @pl.when(ti == 0)
    def _():
        o_ref[...] = jnp.zeros_like(o_ref)

    def _accum_full():
        o_ref[...] += jnp.sum(x_ref[...].astype(jnp.float32), axis=1)[None]

    if rem:
        # All-but-last blocks: unmasked fast path.
        @pl.when(gblk < n_blocks - 1)
        def _():
            _accum_full()

        # Final (ragged) block: static slice of the valid rows only.
        @pl.when(gblk == n_blocks - 1)
        def _():
            o_ref[...] += jnp.sum(
                x_ref[:, :rem, :].astype(jnp.float32), axis=1)[None]
    elif has_pad:
        # Blocks divide T evenly but the 2-way core split has one duplicated
        # (clamped) step; skip its contribution.
        @pl.when(gblk < n_blocks)
        def _():
            _accum_full()
    else:
        _accum_full()


def mos_predictor_forward(feats, weight, bias, *, tile_t=None):
    """feats: [B, T, D] SSL features (f32 or bf16);
    weight: torch-style (1, D) (also accepts (D,) or (D, 1)); bias: scalar.
    Returns: [B] float32 MOS predictions (matches torch output.squeeze(1))."""
    B, T, D = feats.shape
    w = jnp.asarray(weight, jnp.float32).reshape(1, D)
    b = jnp.asarray(bias, jnp.float32).reshape(())

    itemsize = jnp.dtype(feats.dtype).itemsize
    sublane = 16 if itemsize == 2 else 8  # bf16 vs f32 tiling granularity

    # --- batch tiling -------------------------------------------------------
    # B <= 8: single whole-batch tile. B > 8: 8-row tiles with a cdiv grid;
    # the ragged tail block is handled by Pallas boundary-block semantics
    # (garbage rows never touch valid rows; out-of-bounds writes are dropped).
    tile_b = B if B <= 8 else 8
    n_b = pl.cdiv(B, tile_b)

    # --- time tiling --------------------------------------------------------
    vmem_cap = _vmem_capacity_bytes()
    budget = min(vmem_cap // 4, 16 << 20)   # per-buffer cap (review: 12-16 MiB)
    per_row = tile_b * D * itemsize
    total_bytes = B * T * D * itemsize
    if tile_t is None:
        max_rows = max(sublane, (budget // per_row) // sublane * sublane)
        tile_t = min(T, max_rows)
        # Guarantee >=2 time blocks for anything bigger than a few MiB so the
        # DMA pipeline can overlap and both cores get time work.
        if total_bytes > (8 << 20) and tile_t >= T:
            tile_t = max(sublane, pl.cdiv(pl.cdiv(T, 2), sublane) * sublane)
    # Validate caller/auto tile_t: multiple of the sublane granularity or == T.
    if tile_t < T:
        tile_t = max(sublane, (tile_t // sublane) * sublane)
    tile_t = min(tile_t, T)

    n_blocks = pl.cdiv(T, tile_t)
    rem = T % tile_t  # Python int; 0 when blocks divide T (incl. tile_t == T)

    # --- 2-way time split across TensorCores (megacore) ---------------------
    n_p = 2 if n_blocks >= 2 else 1
    n_t = pl.cdiv(n_blocks, n_p)
    has_pad = (n_p * n_t) > n_blocks

    def feat_index_map(p, bi, ti):
        # Clamp the (at most one) padded step of the core split to the last
        # valid block; the kernel masks its contribution off.
        return (bi, jnp.minimum(p * n_t + ti, n_blocks - 1), 0)

    block_bytes = tile_b * tile_t * D * itemsize
    # Deeper buffering only pays when blocks are small and the loop is long.
    if block_bytes <= (4 << 20) and n_t >= 4:
        n_buf = 3
        feat_spec = pl.BlockSpec((tile_b, tile_t, D), feat_index_map,
                                 pipeline_mode=pl.Buffered(3))
    else:
        n_buf = 2
        feat_spec = pl.BlockSpec((tile_b, tile_t, D), feat_index_map)

    vmem_limit = int(min(
        vmem_cap,
        max(16 << 20, n_buf * block_bytes + 2 * tile_b * D * 4 + (4 << 20))))

    kernel = functools.partial(_mos_sum_kernel, n_t=n_t, n_blocks=n_blocks,
                               rem=rem, has_pad=has_pad)

    partial = pl.pallas_call(
        kernel,
        out_shape=jax.ShapeDtypeStruct((n_p, B, D), jnp.float32),
        grid_spec=pltpu.PrefetchScalarGridSpec(
            num_scalar_prefetch=0,
            grid=(n_p, n_b, n_t),
            in_specs=[feat_spec],
            out_specs=pl.BlockSpec((1, tile_b, D),
                                   lambda p, bi, ti: (p, bi, 0)),
        ),
        compiler_params=pltpu.CompilerParams(
            dimension_semantics=("parallel", "parallel", "arbitrary"),
            vmem_limit_bytes=vmem_limit),
    )(feats)

    # Tiny XLA epilogue: combine per-core partial sums, take the time mean,
    # and apply the 768->1 head (lane-dense multiply + reduce; no MXU).
    mean = jnp.sum(partial, axis=0) * (1.0 / float(T))  # (B, D) f32
    return jnp.sum(mean * w, axis=-1) + b                # (B,)  == squeeze(1)


def reference_forward(feats, weight, bias):
    w = jnp.asarray(weight, jnp.float32).reshape(1, -1)
    m = jnp.mean(feats.astype(jnp.float32), axis=1)
    return jnp.sum(m * w, axis=-1) + jnp.asarray(bias, jnp.float32).reshape(())


if __name__ == "__main__":
    key = jax.random.PRNGKey(0)
    k_x, k_w, k_b = jax.random.split(key, 3)

    B, T, D = 2, 16, SSL_FEATURES
    # Stand-in for ssl_model(inputs, mask=False, features_only=True)['x'].
    feats = jax.random.normal(k_x, (B, T, D), dtype=jnp.float32)

    # Deterministic init of nn.Linear(768, 1): weight (1, 768) torch layout,
    # scalar bias.
    bound = 1.0 / (D ** 0.5)
    weight = jax.random.uniform(k_w, (1, D), jnp.float32, -bound, bound)
    bias = jax.random.uniform(k_b, (), jnp.float32, -bound, bound)

    # 1) Default auto-tiled path (single block).
    out = jax.block_until_ready(mos_predictor_forward(feats, weight, bias))
    ref = reference_forward(feats, weight, bias)
    assert out.shape == (B,)
    assert jnp.allclose(out, ref, atol=1e-4, rtol=1e-4), (out, ref)

    # 2) Multi-block ragged time reduction + 2-way core split (exercises the
    #    static-slice tail and the clamped padded step).
    T2 = 20
    feats2 = jax.random.normal(k_x, (B, T2, D), dtype=jnp.float32)
    out2 = jax.block_until_ready(
        mos_predictor_forward(feats2, weight, bias, tile_t=8))
    ref2 = reference_forward(feats2, weight, bias)
    assert jnp.allclose(out2, ref2, atol=1e-4, rtol=1e-4), (out2, ref2)

    # 3) bf16 feature input (halves HBM traffic; accumulation stays f32).
    feats_bf16 = feats.astype(jnp.bfloat16)
    out3 = jax.block_until_ready(mos_predictor_forward(feats_bf16, weight, bias))
    ref3 = reference_forward(feats_bf16, weight, bias)
    assert jnp.allclose(out3, ref3, atol=2e-3, rtol=2e-3), (out3, ref3)

    # 4) B > 8 with a ragged batch tile and even time blocks.
    B4, T4 = 10, 24
    feats4 = jax.random.normal(k_x, (B4, T4, D), dtype=jnp.float32)
    out4 = jax.block_until_ready(
        mos_predictor_forward(feats4, weight, bias, tile_t=8))
    ref4 = reference_forward(feats4, weight, bias)
    assert out4.shape == (B4,)
    assert jnp.allclose(out4, ref4, atol=1e-4, rtol=1e-4), (out4, ref4)

    print("KERNEL_OK")
</pallas_src>

<mosaic_0001>
module attributes {stable_mosaic.version = 11 : i64} {
  func.func @_mos_sum_kernel(%arg0: i32, %arg1: i32, %arg2: i32, %arg3: memref<2x16x768xf32, #tpu.memory_space<vmem>>, %arg4: memref<1x2x768xf32, #tpu.memory_space<vmem>>) attributes {dimension_semantics = [#tpu.dimension_semantics<parallel>, #tpu.dimension_semantics<parallel>, #tpu.dimension_semantics<arbitrary>], iteration_bounds = array<i64: 1, 1, 1>, scalar_prefetch = 0 : i64, scratch_operands = 0 : i64, tpu.core_type = #tpu.core_type<tc>, window_params = [{transform_indices = @transform_0, window_bounds = array<i64: 2, 16, 768>}, {transform_indices = @transform_1, window_bounds = array<i64: 1, 2, 768>}]} {
    %c0_i32 = arith.constant 0 : i32
    %0 = arith.cmpi eq, %arg2, %c0_i32 : i32
    %1 = arith.extui %0 : i1 to i32
    %c0_i32_0 = arith.constant 0 : i32
    %2 = arith.cmpi ne, %1, %c0_i32_0 : i32
    scf.if %2 {
      %cst_9 = arith.constant 0.000000e+00 : f32
      %9 = vector.broadcast %cst_9 : f32 to vector<1x2x768xf32>
      %c0_10 = arith.constant 0 : index
      %c0_11 = arith.constant 0 : index
      %c0_12 = arith.constant 0 : index
      %10 = vector.load %arg4[%c0_10, %c0_11, %c0_12] : memref<1x2x768xf32, #tpu.memory_space<vmem>>, vector<1x2x768xf32>
      tpu.vector_store %arg4[%c0_10, %c0_11, %c0_12], %9 {strides = array<i32>} : memref<1x2x768xf32, #tpu.memory_space<vmem>>, vector<1x2x768xf32>,
    } else {
    }
    %c0 = arith.constant 0 : index
    %c0_1 = arith.constant 0 : index
    %c0_2 = arith.constant 0 : index
    %3 = vector.load %arg4[%c0, %c0_1, %c0_2] : memref<1x2x768xf32, #tpu.memory_space<vmem>>, vector<1x2x768xf32>
    %c0_3 = arith.constant 0 : index
    %c0_4 = arith.constant 0 : index
    %c0_5 = arith.constant 0 : index
    %4 = vector.load %arg3[%c0_3, %c0_4, %c0_5] : memref<2x16x768xf32, #tpu.memory_space<vmem>>, vector<2x16x768xf32>
    %cst = arith.constant dense<0.000000e+00> : vector<2x768xf32>
    %5 = vector.multi_reduction <add>, %4, %cst [1] : vector<2x16x768xf32> to vector<2x768xf32>
    %6 = vector.shape_cast %5 : vector<2x768xf32> to vector<1x2x768xf32>
    %7 = arith.addf %3, %6 : vector<1x2x768xf32>
    %c0_6 = arith.constant 0 : index
    %c0_7 = arith.constant 0 : index
    %c0_8 = arith.constant 0 : index
    %8 = vector.load %arg4[%c0_6, %c0_7, %c0_8] : memref<1x2x768xf32, #tpu.memory_space<vmem>>, vector<1x2x768xf32>
    tpu.vector_store %arg4[%c0_6, %c0_7, %c0_8], %7 {strides = array<i32>} : memref<1x2x768xf32, #tpu.memory_space<vmem>>, vector<1x2x768xf32>,
    return
  }
  func.func @transform_0(%arg0: i32, %arg1: i32, %arg2: i32) -> (i32, i32, i32) {
    %c1_i32 = arith.constant 1 : i32
    %0 = arith.muli %arg0, %c1_i32 : i32
    %1 = arith.addi %0, %arg2 : i32
    %c0_i32 = arith.constant 0 : i32
    %2 = arith.minsi %1, %c0_i32 : i32
    %c0_i32_0 = arith.constant 0 : i32
    %c0_i32_1 = arith.constant 0 : i32
    return %arg1, %2, %c0_i32_0 : i32, i32, i32
  }
  func.func @transform_1(%arg0: i32, %arg1: i32, %arg2: i32) -> (i32, i32, i32) {
    %c0_i32 = arith.constant 0 : i32
    %c0_i32_0 = arith.constant 0 : i32
    return %arg0, %arg1, %c0_i32 : i32, i32, i32
  }
}

</mosaic_0001>

<llo_original>
// kernel: tpu_custom_call.1
$region0: #{tpu_custom_call.1}
  #allocation0 [shape = 'u32[]', space=smem, size = 0x4, offset = 0x4, fixed_abs, tag = 'smem constant byte address 0x4 - core index']
  #allocation1 [shape = 'u32[72,128]{1,0:T(1,128)}', space=vmem, size = 0x9000, scoped, tag = 'internal scratch']
  %s0 = inlined_call_operand.hbm [shape: f32[2,16,768], index: 0, kind: input, shape index: {}]
  %s1 = inlined_call_operand.hbm [shape: f32[1,2,768], index: 1, kind: output, shape index: {}]
  %s2 = sld [smem:[#allocation0]]
  $region22: #{tpu_custom_call.1} parent=0
    _
  %s4 = ssub.s32 1, %s2
  %s5 = scalar_select 0, %s4, %s2
  $region1: #{tpu_custom_call.1} parent=0
    #allocation2 [shape = 'u8[98304]{0}', space=vmem, size = 0x18000, scoped, tag = 'input window, operand 0, single buffered']
    #allocation3 [shape = 's32[1]{0}', space=sflag, size = 0x4, scoped, tag = 'scoped memory for tpu_custom_call.1']
    #allocation4 [shape = 's32[1]{0}', space=sflag, size = 0x4, scoped, tag = 'scoped memory for tpu_custom_call.1']
    #allocation5 [shape = 'u8[6144]{0}', space=vmem, size = 0x1800, scoped, tag = 'output window, operand 0, single buffered']
    %6 = vsyncpa [#allocation3], 0
    %7 = vsyncpa [#allocation4], 0
    // Predicated region
    $region2: #{tpu_custom_call.1} parent=1 // pred_check
      _
    $region3: #{tpu_custom_call.1} parent=1 // pred_check_branch
      %9 = sbr.rel (0) target = $region5
    $region4: #{tpu_custom_call.1} parent=1 // pred_region
      %s10 = sadd.s32 0, 0
      %p11 = scmp.lt.s32.totalorder %s10, 0
      %s12 = scalar_select %p11, %s10, 0
      %s13 = smul.u32 2, %s12
      %15 = vsyncadd [#allocation3], 0
      %s16 = smul.addr %s13, 6
      %s17 = smul.addr %s16, 8
      %s18 = scalar_lea.hbm %s0, %s17
      %s19 = sshll.u32 %s18, 4
      %s20 = int_to_ptr.hbm [resolvable:$true] %s19
      %s21 = sshll.u32 [#allocation2], 4
      %s22 = int_to_ptr.vmem [resolvable:$true] %s21
      %27 = dma.hbm_to_vmem [thread:$0]  %s20, 3072, %s22, [#allocation3], 768, 768, 48
    $region5: #{tpu_custom_call.1} parent=1 // pred_fallthru
      _
    // Predicated region
    $region6: #{tpu_custom_call.1} parent=1 // pred_check
      _
    $region7: #{tpu_custom_call.1} parent=1 // pred_check_branch
      %29 = sbr.rel (0) target = $region9
    $region8: #{tpu_custom_call.1} parent=1 // pred_region
      %31 = dma.done [#allocation3], 3072
    $region9: #{tpu_custom_call.1} parent=1 // pred_fallthru
      _
    %s32 = sadd.s32 0, 0
    %p33 = scmp.lt.s32.totalorder %s32, 0
    %s34 = scalar_select %p33, %s32, 0
    %s35 = smul.u32 2, %s34
    %p36 = scmp.eq.s32.totalorder 0, 0
    // Predicated region
    $region10: #{tpu_custom_call.1} parent=1 // pred_check
      %p37 = pneg %p36
    $region11: #{tpu_custom_call.1} parent=1 // pred_check_branch
      %39 = sbr.rel (%p37) target = $region13
    $region12: #{tpu_custom_call.1} parent=1 // pred_region
      %40 = vst [vmem:[#allocation5] sm:$0xff] 0.0
      %41 = vst [vmem:[#allocation5 + $0x8] sm:$0xf] 0.0
    $region13: #{tpu_custom_call.1} parent=1 // pred_fallthru
      _
    %v42 = vld [vmem:[#allocation5] sm:$0xff]
    %v43 = vld [vmem:[#allocation5 + $0x8] sm:$0xf]
    %v44 = vld [vmem:[#allocation2] sm:$0xff]
    %v45 = vld [vmem:[#allocation2 + $0x8] sm:$0xff]
    %v46 = vld [vmem:[#allocation2 + $0x10] sm:$0xff]
    %v47 = vld [vmem:[#allocation2 + $0x18] sm:$0xff]
    %v48 = vld [vmem:[#allocation2 + $0x20] sm:$0xff]
    %v49 = vld [vmem:[#allocation2 + $0x28] sm:$0xff]
    %v50 = vld [vmem:[#allocation2 + $0x30] sm:$0xff]
    %v51 = vld [vmem:[#allocation2 + $0x38] sm:$0xff]
    %v52 = vld [vmem:[#allocation2 + $0x40] sm:$0xff]
    %v53 = vld [vmem:[#allocation2 + $0x48] sm:$0xff]
    %v54 = vld [vmem:[#allocation2 + $0x50] sm:$0xff]
    %v55 = vld [vmem:[#allocation2 + $0x58] sm:$0xff]
    %v56 = vld [vmem:[#allocation2 + $0x60] sm:$0xff]
    %v57 = vld [vmem:[#allocation2 + $0x68] sm:$0xff]
    %v58 = vld [vmem:[#allocation2 + $0x70] sm:$0xff]
    %v59 = vld [vmem:[#allocation2 + $0x78] sm:$0xff]
    %v60 = vld [vmem:[#allocation2 + $0x80] sm:$0xff]
    %v61 = vld [vmem:[#allocation2 + $0x88] sm:$0xff]
    %v62 = vld [vmem:[#allocation2 + $0x90] sm:$0xff]
    %v63 = vld [vmem:[#allocation2 + $0x98] sm:$0xff]
    %v64 = vld [vmem:[#allocation2 + $0xa0] sm:$0xff]
    %v65 = vld [vmem:[#allocation2 + $0xa8] sm:$0xff]
    %v66 = vld [vmem:[#allocation2 + $0xb0] sm:$0xff]
    %v67 = vld [vmem:[#allocation2 + $0xb8] sm:$0xff]
    %v68 = vadd.f32 %v44, %v50
    %v69 = vrot.slane %v68, 4
    %v70 = vadd.f32 %v68, %v69
    %v71 = vrot.slane %v70, 2
    %v72 = vadd.f32 %v70, %v71
    %v73 = vrot.slane %v72, 1
    %v74 = vadd.f32 %v72, %v73
    %v75 = vadd.f32 %v45, %v51
    %v76 = vrot.slane %v75, 4
    %v77 = vadd.f32 %v75, %v76
    %v78 = vrot.slane %v77, 2
    %v79 = vadd.f32 %v77, %v78
    %v80 = vrot.slane %v79, 1
    %v81 = vadd.f32 %v79, %v80
    %v82 = vadd.f32 %v46, %v52
    %v83 = vrot.slane %v82, 4
    %v84 = vadd.f32 %v82, %v83
    %v85 = vrot.slane %v84, 2
    %v86 = vadd.f32 %v84, %v85
    %v87 = vrot.slane %v86, 1
    %v88 = vadd.f32 %v86, %v87
    %v89 = vadd.f32 %v47, %v53
    %v90 = vrot.slane %v89, 4
    %v91 = vadd.f32 %v89, %v90
    %v92 = vrot.slane %v91, 2
    %v93 = vadd.f32 %v91, %v92
    %v94 = vrot.slane %v93, 1
    %v95 = vadd.f32 %v93, %v94
    %v96 = vadd.f32 %v48, %v54
    %v97 = vrot.slane %v96, 4
    %v98 = vadd.f32 %v96, %v97
    %v99 = vrot.slane %v98, 2
    %v100 = vadd.f32 %v98, %v99
    %v101 = vrot.slane %v100, 1
    %v102 = vadd.f32 %v100, %v101
    %v103 = vadd.f32 %v49, %v55
    %v104 = vrot.slane %v103, 4
    %v105 = vadd.f32 %v103, %v104
    %v106 = vrot.slane %v105, 2
    %v107 = vadd.f32 %v105, %v106
    %v108 = vrot.slane %v107, 1
    %v109 = vadd.f32 %v107, %v108
    %v110 = vadd.f32 %v56, %v62
    %v111 = vrot.slane %v110, 4
    %v112 = vadd.f32 %v110, %v111
    %v113 = vrot.slane %v112, 2
    %v114 = vadd.f32 %v112, %v113
    %v115 = vrot.slane %v114, 1
    %v116 = vadd.f32 %v114, %v115
    %v117 = vadd.f32 %v57, %v63
    %v118 = vrot.slane %v117, 4
    %v119 = vadd.f32 %v117, %v118
    %v120 = vrot.slane %v119, 2
    %v121 = vadd.f32 %v119, %v120
    %v122 = vrot.slane %v121, 1
    %v123 = vadd.f32 %v121, %v122
    %v124 = vadd.f32 %v58, %v64
    %v125 = vrot.slane %v124, 4
    %v126 = vadd.f32 %v124, %v125
    %v127 = vrot.slane %v126, 2
    %v128 = vadd.f32 %v126, %v127
    %v129 = vrot.slane %v128, 1
    %v130 = vadd.f32 %v128, %v129
    %v131 = vadd.f32 %v59, %v65
    %v132 = vrot.slane %v131, 4
    %v133 = vadd.f32 %v131, %v132
    %v134 = vrot.slane %v133, 2
    %v135 = vadd.f32 %v133, %v134
    %v136 = vrot.slane %v135, 1
    %v137 = vadd.f32 %v135, %v136
    %v138 = vadd.f32 %v60, %v66
    %v139 = vrot.slane %v138, 4
    %v140 = vadd.f32 %v138, %v139
    %v141 = vrot.slane %v140, 2
    %v142 = vadd.f32 %v140, %v141
    %v143 = vrot.slane %v142, 1
    %v144 = vadd.f32 %v142, %v143
    %v145 = vadd.f32 %v61, %v67
    %v146 = vrot.slane %v145, 4
    %v147 = vadd.f32 %v145, %v146
    %v148 = vrot.slane %v147, 2
    %v149 = vadd.f32 %v147, %v148
    %v150 = vrot.slane %v149, 1
    %v151 = vadd.f32 %v149, %v150
    %v164 = vrot.slane %v81, 6
    %v165 = vrot.slane %v88, 4
    %v166 = vrot.slane %v95, 2
    %v167 = vrot.slane %v109, 6
    %v168 = vrot.slane %v123, 6
    %v169 = vrot.slane %v130, 4
    %v170 = vrot.slane %v137, 2
    %v171 = vrot.slane %v151, 6
    %vm172 = vcmask 1041408
    %v173 = vsel %vm172, %v74, %v164
    %vm174 = vcmask 1045508
    %v175 = vsel %vm174, %v165, %v166
    %vm176 = vcmask 1043456
    %v177 = vsel %vm176, %v173, %v175
    %v178 = vsel %vm172, %v102, %v167
    %v179 = vsel %vm172, %v116, %v168
    %v180 = vsel %vm174, %v169, %v170
    %v181 = vsel %vm176, %v179, %v180
    %v182 = vsel %vm172, %v144, %v171
    %vm183 = vcmask 1044484
    %v184 = vsel %vm183, %v177, %v177
    %vm185 = vcmask 1046534
    %v186 = vsel %vm185, %v177, %v184
    %v187 = vrot.slane %v181, 7
    %vm188 = vcmask 1041409
    %v189 = vsel %vm188, %v187, %v186
    %vm190 = vcmask 1043459
    %v191 = vsel %vm190, %v187, %v189
    %vm192 = vcmask 1045509
    %v193 = vsel %vm192, %v187, %v191
    %vm194 = vcmask 1047559
    %v195 = vsel %vm194, %v187, %v193
    %v196 = vsel %vm183, %v178, %v178
    %v197 = vsel %vm185, %v178, %v196
    %v198 = vrot.slane %v182, 7
    %v199 = vsel %vm188, %v198, %v197
    %v200 = vsel %vm190, %v198, %v199
    %v201 = vsel %vm192, %v198, %v200
    %v202 = vsel %vm194, %v198, %v201
    %v205 = vadd.f32 %v42, %v195
    %v206 = vadd.f32 %v43, %v202
    %207 = vst [vmem:[#allocation5] sm:$0xff] %v205
    %208 = vst [vmem:[#allocation5 + $0x8] sm:$0xf] %v206
    // Predicated region
    $region14: #{tpu_custom_call.1} parent=1 // pred_check
      _
    $region15: #{tpu_custom_call.1} parent=1 // pred_check_branch
      %210 = sbr.rel (0) target = $region17
    $region16: #{tpu_custom_call.1} parent=1 // pred_region
      %212 = vsyncadd [#allocation4], 0
      %s214 = sshll.u32 [#allocation5], 4
      %s215 = int_to_ptr.vmem [resolvable:$true] %s214
      %s216 = sshll.u32 %s1, 4
      %s217 = int_to_ptr.hbm [resolvable:$true] %s216
      %219 = dma.vmem_to_hbm [thread:$0]  %s215, 192, %s217, [#allocation4]
    $region17: #{tpu_custom_call.1} parent=1 // pred_fallthru
      _
    // Predicated region
    $region18: #{tpu_custom_call.1} parent=1 // pred_check
      _
    $region19: #{tpu_custom_call.1} parent=1 // pred_check_branch
      %221 = sbr.rel (0) target = $region21
    $region20: #{tpu_custom_call.1} parent=1 // pred_region
      %223 = dma.done [#allocation4], 192
    $region21: #{tpu_custom_call.1} parent=1 // pred_fallthru
      _
    %224 = vsyncpa [#allocation3], 1
    %225 = vsyncpa [#allocation4], 1

</llo_original>
